<compile_context>
chip_gen: v7x
topology: tpu7x:2x2x1
jax: 0.10.0
libtpu: 0.0.40
codegen_flags: <defaults>
</compile_context>

<pallas_src>
import jax
import jax.numpy as jnp
from jax.experimental import pallas as pl
from jax.experimental.pallas import tpu as pltpu


def _round_up(x, m):
    return ((x + m - 1) // m) * m


# ----------------------------------------------------------------------------
# Kernel 1: row-tiled dense matmul (used for the emb @ W hoist and the final
# concat projections).  Output lane dim is padded to a multiple of 128.
# Input dtypes are preserved (bf16 activations hit the native bf16 MXU path);
# accumulation / output is f32.
# ----------------------------------------------------------------------------
def _matmul_kernel(x_ref, w_ref, o_ref):
    o_ref[...] = jnp.dot(x_ref[...], w_ref[...],
                         preferred_element_type=jnp.float32)


def dense_matmul(x, w, *, row_tile=512):
    """x: (M, K), w: (K, N) -> (M, N) f32, row-tiled & lane-dense internally."""
    M, K = x.shape
    K2, N = w.shape
    assert K == K2
    tr = min(row_tile, _round_up(M, 8))
    Mp = _round_up(M, tr)
    Np = _round_up(N, 128)
    x_p = jnp.pad(x, ((0, Mp - M), (0, 0)))            # keep input dtype
    w_p = jnp.pad(w, ((0, 0), (0, Np - N)))
    out = pl.pallas_call(
        _matmul_kernel,
        out_shape=jax.ShapeDtypeStruct((Mp, Np), jnp.float32),
        grid=(Mp // tr,),
        in_specs=[pl.BlockSpec((tr, K), lambda i: (i, 0)),
                  pl.BlockSpec((K, Np), lambda i: (0, 0))],
        out_specs=pl.BlockSpec((tr, Np), lambda i: (i, 0)),
        compiler_params=pltpu.CompilerParams(
            dimension_semantics=("parallel",),
            vmem_limit_bytes=32 * 1024 * 1024),
    )(x_p, w_p)
    return out[:M, :N]


# ----------------------------------------------------------------------------
# Adjacency preparation (done ONCE per forward, shared across layers):
#   * pad + cast to bf16 (dominant HBM stream)
#   * compute, per (row-tile, behavior), the ordered list of nonzero k-tile
#     indices padded (by repeating the last nonzero index) plus a count.
# The padded repeats make consecutive grid steps map to the SAME block index,
# so Pallas elides their DMAs; the compute is skipped with pl.when.
# ----------------------------------------------------------------------------
def prepare_adjacency(mats, *, row_tile, k_tile):
    B, N, M = mats.shape
    TN = min(row_tile, _round_up(N, 8))       # row tile (sublane multiple of 8)
    Np = _round_up(N, TN)
    TM = min(k_tile, _round_up(M, 128))       # contraction tile (lane mult of 128)
    Mp = _round_up(M, TM)
    nt, nk = Np // TN, Mp // TM

    mats_p = jnp.pad(mats.astype(jnp.bfloat16),
                     ((0, 0), (0, Np - N), (0, Mp - M)))          # (B, Np, Mp)

    # Nonzero structure at (TN, TM) tile granularity.
    tiles = mats_p.reshape(B, nt, TN, nk, TM)
    nz = jnp.any(tiles != 0, axis=(2, 4))                         # (B, nt, nk)
    nz = jnp.transpose(nz, (1, 0, 2))                             # (nt, B, nk)
    counts = jnp.sum(nz, axis=-1).astype(jnp.int32)               # (nt, B)

    # Nonzero k-tile indices first (ascending), then pad by repeating the last
    # nonzero index (or 0 when the whole (i, b) block is empty).
    order = jnp.argsort(jnp.logical_not(nz).astype(jnp.int32),
                        axis=-1, stable=True)                     # (nt, B, nk)
    pos = jnp.arange(nk, dtype=jnp.int32)[None, None, :]
    last = jnp.maximum(counts[:, :, None] - 1, 0)
    clipped = jnp.minimum(pos, last)
    tile_idx = jnp.take_along_axis(order, clipped, axis=-1).astype(jnp.int32)

    # Flatten the SMEM-bound scalar-prefetch arrays (avoid 2D/3D SMEM padding).
    return dict(mats_p=mats_p,
                tile_idx=tile_idx.reshape(-1),    # (nt*B*nk,) int32
                counts=counts.reshape(-1),        # (nt*B,)    int32
                B=B, N=N, M=M, TN=TN, TM=TM, Np=Np, Mp=Mp, nt=nt, nk=nk)


# ----------------------------------------------------------------------------
# Kernel 2: one "side" (user or item) of a GNNLayer, tiled.
#   Grid = (row_tiles, behaviors, k_tiles); per (i, b) row tile:
#     s        = sum_{nonzero m} mats[b, i-tile, m-tile] @ embW[m-tile]  (TN,Dp)
#     single   = PReLU(s)                 (written at last k step, bf16)
#     m_acc   += s                        (running behavior sum)
#     multi    = PReLU(m_acc / B)         (written at last behavior & k step)
#   Row axis is "parallel" (megacore); behavior / K axes are "arbitrary" so the
#   resident `multi` output and the scratch accumulators stay correct.
# ----------------------------------------------------------------------------
def _make_gnn_side_kernel(inv_b, B, nk):
    def kernel(tile_idx_ref, counts_ref, alpha_ref, mats_ref, embw_ref,
               multi_ref, single_ref, s_acc, m_acc):
        del tile_idx_ref  # only used by the index_maps
        i = pl.program_id(0)
        b = pl.program_id(1)
        m = pl.program_id(2)
        nb = pl.num_programs(1)
        nm = pl.num_programs(2)

        @pl.when(jnp.logical_and(b == 0, m == 0))
        def _():
            m_acc[...] = jnp.zeros_like(m_acc)

        @pl.when(m == 0)
        def _():
            s_acc[...] = jnp.zeros_like(s_acc)

        # Skip compute on padded (repeated) k-tile steps; their DMAs are elided
        # because the remapped block index does not change between steps.
        @pl.when(m < counts_ref[i * B + b])
        def _():
            # bf16 x bf16 on the MXU, f32 accumulation.
            s_acc[...] += jnp.dot(mats_ref[0], embw_ref[...],
                                  preferred_element_type=jnp.float32)

        @pl.when(m == nm - 1)
        def _():
            s = s_acc[...]
            m_acc[...] += s
            a = alpha_ref[0]
            single_ref[0] = jnp.where(s > 0, s, a * s).astype(single_ref.dtype)

        @pl.when(jnp.logical_and(b == nb - 1, m == nm - 1))
        def _():
            a = alpha_ref[0]
            mu = m_acc[...] * inv_b                          # mean over behaviors
            multi_ref[...] = jnp.where(mu > 0, mu, a * mu)   # PReLU (f32)

    return kernel


def gnn_side(prep, emb, w, alpha, *, vmem_limit_bytes=48 * 1024 * 1024):
    """prep: prepare_adjacency(...) result for one side, emb: (M, D),
    w: (D, D), alpha: (1,) f32.
    Returns multi (N, D) f32, single (B, N, D) bf16."""
    B, N, M = prep["B"], prep["N"], prep["M"]
    TN, TM, Np, Mp = prep["TN"], prep["TM"], prep["Np"], prep["Mp"]
    nt, nk = prep["nt"], prep["nk"]
    Mi, D = emb.shape
    assert Mi == M

    Dp = _round_up(D, 128)                    # lane-dense hidden dim

    # Hoisted projection (associativity): embW = emb @ W once per layer side,
    # streamed in bf16 so the refetch traffic is small vs the adjacency.
    embw = dense_matmul(emb, w).astype(jnp.bfloat16)               # (M, D)
    embw_p = jnp.pad(embw, ((0, Mp - M), (0, Dp - D)))             # (Mp, Dp) bf16

    kernel = _make_gnn_side_kernel(1.0 / B, B, nk)
    multi, single = pl.pallas_call(
        kernel,
        out_shape=(jax.ShapeDtypeStruct((Np, Dp), jnp.float32),
                   jax.ShapeDtypeStruct((B, Np, Dp), jnp.bfloat16)),
        grid_spec=pltpu.PrefetchScalarGridSpec(
            num_scalar_prefetch=2,            # tile_idx, counts -> SMEM
            grid=(nt, B, nk),
            in_specs=[
                pl.BlockSpec(memory_space=pltpu.SMEM),             # alpha
                pl.BlockSpec(                                      # mats tile
                    (1, TN, TM),
                    lambda i, b, m, t, c: (b, i, t[(i * B + b) * nk + m])),
                pl.BlockSpec(                                      # embW tile
                    (TM, Dp),
                    lambda i, b, m, t, c: (t[(i * B + b) * nk + m], 0)),
            ],
            out_specs=(
                pl.BlockSpec((TN, Dp), lambda i, b, m, t, c: (i, 0)),      # multi
                pl.BlockSpec((1, TN, Dp), lambda i, b, m, t, c: (b, i, 0)),  # single
            ),
            scratch_shapes=[pltpu.VMEM((TN, Dp), jnp.float32),     # s_acc
                            pltpu.VMEM((TN, Dp), jnp.float32)],    # m_acc
        ),
        compiler_params=pltpu.CompilerParams(
            dimension_semantics=("parallel", "arbitrary", "arbitrary"),
            vmem_limit_bytes=vmem_limit_bytes),
    )(prep["tile_idx"], prep["counts"], alpha, prep["mats_p"], embw_p)
    return multi[:N, :D], single[:, :N, :D]


# ----------------------------------------------------------------------------
# Parameter init (deterministic, mirrors the PyTorch __init__ shapes)
# ----------------------------------------------------------------------------
def xavier_uniform(key, shape):
    fan_in, fan_out = shape[0], shape[1]
    bound = (6.0 / (fan_in + fan_out)) ** 0.5
    return jax.random.uniform(key, shape, jnp.float32, -bound, bound)


def init_params(key, user_num, item_num, hidden_dim, layer_num):
    keys = jax.random.split(key, 4 + 2 * layer_num)
    params = {
        "user_embedding": xavier_uniform(keys[0], (user_num, hidden_dim)),
        "item_embedding": xavier_uniform(keys[1], (item_num, hidden_dim)),
        "u_concat_w": xavier_uniform(keys[2], (layer_num * hidden_dim, hidden_dim)),
        "i_concat_w": xavier_uniform(keys[3], (layer_num * hidden_dim, hidden_dim)),
        "layers": [],
    }
    for li in range(layer_num):
        params["layers"].append({
            "u_w": xavier_uniform(keys[4 + 2 * li], (hidden_dim, hidden_dim)),
            "i_w": xavier_uniform(keys[5 + 2 * li], (hidden_dim, hidden_dim)),
            "prelu_alpha": jnp.array([0.25], dtype=jnp.float32),   # nn.PReLU() default
        })
    return params


# ----------------------------------------------------------------------------
# BGNN forward (glue in plain JAX, compute in Pallas)
# ----------------------------------------------------------------------------
def bgnn_forward(params, behavior_mats, behavior_mats_t, *,
                 row_tile=512, k_tile=2048):
    # Adjacency pad/cast + tile-sparsity structure: once per forward, shared by
    # every layer (the PyTorch module reuses the same behavior_mats per layer).
    u_prep = prepare_adjacency(behavior_mats, row_tile=row_tile, k_tile=k_tile)
    i_prep = prepare_adjacency(behavior_mats_t, row_tile=row_tile, k_tile=k_tile)

    user_emb = params["user_embedding"]
    item_emb = params["item_embedding"]
    ue_list, ie_list, ues_list, ies_list = [], [], [], []
    for layer_p in params["layers"]:
        alpha = layer_p["prelu_alpha"]
        # user side: behavior_mats (B, U, I) @ item_emb
        multi_u, single_u = gnn_side(u_prep, item_emb, layer_p["u_w"], alpha)
        # item side: behavior_mats_t (B, I, U) @ user_emb
        multi_i, single_i = gnn_side(i_prep, user_emb, layer_p["i_w"], alpha)
        user_emb, item_emb = multi_u, multi_i
        ue_list.append(multi_u)
        ie_list.append(multi_i)
        ues_list.append(single_u)
        ies_list.append(single_i)

    user_cat = jnp.concatenate(ue_list, axis=1)          # (U, L*D) f32
    item_cat = jnp.concatenate(ie_list, axis=1)          # (I, L*D) f32
    users_cat = jnp.concatenate(ues_list, axis=2)        # (B, U, L*D) bf16
    items_cat = jnp.concatenate(ies_list, axis=2)        # (B, I, L*D) bf16

    u_out = dense_matmul(user_cat, params["u_concat_w"])
    i_out = dense_matmul(item_cat, params["i_concat_w"])

    # Singles are bf16: use the bf16 MXU path for the big (B*N, L*D) projections.
    ucw_bf = params["u_concat_w"].astype(jnp.bfloat16)
    icw_bf = params["i_concat_w"].astype(jnp.bfloat16)
    Bb, U, LD = users_cat.shape
    us_out = dense_matmul(users_cat.reshape(Bb * U, LD), ucw_bf).reshape(Bb, U, -1)
    Bb2, I, LD2 = items_cat.shape
    is_out = dense_matmul(items_cat.reshape(Bb2 * I, LD2), icw_bf).reshape(Bb2, I, -1)
    return u_out, i_out, us_out, is_out


# ----------------------------------------------------------------------------
# Pure-JAX reference (mirrors the PyTorch forward order exactly) for validation
# ----------------------------------------------------------------------------
def _prelu(x, a):
    return jnp.where(x > 0, x, a * x)


def bgnn_forward_ref(params, behavior_mats, behavior_mats_t):
    mats = behavior_mats.astype(jnp.float32)
    mats_t = behavior_mats_t.astype(jnp.float32)
    user_emb = params["user_embedding"]
    item_emb = params["item_embedding"]
    ue_list, ie_list, ues_list, ies_list = [], [], [], []
    for layer_p in params["layers"]:
        a = layer_p["prelu_alpha"][0]
        u_embs = jnp.einsum("bui,id->bud", mats, item_emb)
        i_embs = jnp.einsum("biu,ud->bid", mats_t, user_emb)
        multi_u = _prelu(jnp.mean(u_embs, 0) @ layer_p["u_w"], a)
        multi_i = _prelu(jnp.mean(i_embs, 0) @ layer_p["i_w"], a)
        single_u = _prelu(u_embs @ layer_p["u_w"], a)
        single_i = _prelu(i_embs @ layer_p["i_w"], a)
        user_emb, item_emb = multi_u, multi_i
        ue_list.append(multi_u); ie_list.append(multi_i)
        ues_list.append(single_u); ies_list.append(single_i)
    user_cat = jnp.concatenate(ue_list, axis=1)
    item_cat = jnp.concatenate(ie_list, axis=1)
    users_cat = jnp.concatenate(ues_list, axis=2)
    items_cat = jnp.concatenate(ies_list, axis=2)
    return (user_cat @ params["u_concat_w"],
            item_cat @ params["i_concat_w"],
            users_cat @ params["u_concat_w"],
            items_cat @ params["i_concat_w"])


if __name__ == "__main__":
    # Small shapes, but with small tile overrides so the grids are multi-tile
    # and the sparse tile-skip path (counts < nk, counts == 0) is exercised.
    USER_NUM, ITEM_NUM = 48, 200
    HIDDEN_DIM, LAYER_NUM, BEHAVIOR_NUM = 32, 2, 3
    ROW_TILE, K_TILE = 16, 128

    key = jax.random.PRNGKey(0)
    k_params, k_adj, k_mask = jax.random.split(key, 3)

    params = init_params(k_params, USER_NUM, ITEM_NUM, HIDDEN_DIM, LAYER_NUM)

    # Synthetic "sparse" behavior adjacency matrices, dense-ified.
    # Quantized once to bf16 here so the kernel and the reference consume the
    # exact same adjacency values (the kernel streams the adjacency in bf16).
    raw = jax.random.uniform(k_adj, (BEHAVIOR_NUM, USER_NUM, ITEM_NUM), jnp.float32)
    mask = jax.random.uniform(k_mask, (BEHAVIOR_NUM, USER_NUM, ITEM_NUM)) < 0.3
    # Behavior 2 touches only the first 128 items -> whole k-tiles / row-tiles
    # are empty, exercising the scalar-prefetched tile-skip.
    item_ok = ((jnp.arange(ITEM_NUM)[None, None, :] < 128) |
               (jnp.arange(BEHAVIOR_NUM)[:, None, None] != 2))
    mask = jnp.logical_and(mask, item_ok)
    behavior_mats = (raw * mask).astype(jnp.bfloat16)           # (B, U, I)
    behavior_mats_t = jnp.transpose(behavior_mats, (0, 2, 1))   # (B, I, U)

    outs = bgnn_forward(params, behavior_mats, behavior_mats_t,
                        row_tile=ROW_TILE, k_tile=K_TILE)
    outs = jax.block_until_ready(outs)

    refs = bgnn_forward_ref(params, behavior_mats, behavior_mats_t)
    for o, r in zip(outs, refs):
        assert o.shape == r.shape
        # bf16 adjacency/embW/singles + hoisted projection change rounding and
        # association order; check a normalized max error.
        err = float(jnp.max(jnp.abs(o - r)) / (jnp.max(jnp.abs(r)) + 1e-8))
        assert err < 5e-2, f"normalized max error too large: {err}"

    print("KERNEL_OK")
</pallas_src>

<mosaic_0001>
module attributes {stable_mosaic.version = 11 : i64} {
  func.func @_matmul_kernel(%arg0: i32, %arg1: memref<200x32xf32, #tpu.memory_space<vmem>>, %arg2: memref<32x128xf32, #tpu.memory_space<vmem>>, %arg3: memref<200x128xf32, #tpu.memory_space<vmem>>) attributes {dimension_semantics = [#tpu.dimension_semantics<parallel>], iteration_bounds = array<i64: 1>, scalar_prefetch = 0 : i64, scratch_operands = 0 : i64, tpu.core_type = #tpu.core_type<tc>, window_params = [{transform_indices = @transform_0, window_bounds = array<i64: 200, 32>}, {pipeline_mode = #tpu.pipeline_mode<synchronous>, transform_indices = @transform_1, window_bounds = array<i64: 32, 128>}, {transform_indices = @transform_2, window_bounds = array<i64: 200, 128>}]} {
    %c0 = arith.constant 0 : index
    %c0_0 = arith.constant 0 : index
    %0 = vector.load %arg1[%c0, %c0_0] : memref<200x32xf32, #tpu.memory_space<vmem>>, vector<200x32xf32>
    %c0_1 = arith.constant 0 : index
    %c0_2 = arith.constant 0 : index
    %1 = vector.load %arg2[%c0_1, %c0_2] : memref<32x128xf32, #tpu.memory_space<vmem>>, vector<32x128xf32>
    %cst = arith.constant dense<0.000000e+00> : vector<200x128xf32>
    %2 = tpu.matmul %0, %1, %cst {dimension_numbers = #tpu.dot_dimension_numbers<[1], [0], [0], [1], [0, 0, 1, 1], [], []>} : vector<200x32xf32>, vector<32x128xf32>, vector<200x128xf32> -> vector<200x128xf32>
    %c0_3 = arith.constant 0 : index
    %c0_4 = arith.constant 0 : index
    %3 = vector.load %arg3[%c0_3, %c0_4] : memref<200x128xf32, #tpu.memory_space<vmem>>, vector<200x128xf32>
    tpu.vector_store %arg3[%c0_3, %c0_4], %2 {strides = array<i32>} : memref<200x128xf32, #tpu.memory_space<vmem>>, vector<200x128xf32>,
    return
  }
  func.func @transform_0(%arg0: i32) -> (i32, i32) {
    %c0_i32 = arith.constant 0 : i32
    %c0_i32_0 = arith.constant 0 : i32
    return %arg0, %c0_i32 : i32, i32
  }
  func.func @transform_1(%arg0: i32) -> (i32, i32) {
    %c0_i32 = arith.constant 0 : i32
    %c0_i32_0 = arith.constant 0 : i32
    %c0_i32_1 = arith.constant 0 : i32
    return %c0_i32, %c0_i32_0 : i32, i32
  }
  func.func @transform_2(%arg0: i32) -> (i32, i32) {
    %c0_i32 = arith.constant 0 : i32
    %c0_i32_0 = arith.constant 0 : i32
    return %arg0, %c0_i32 : i32, i32
  }
}

</mosaic_0001>

<llo_original>
// kernel: tpu_custom_call.1
$region0: #{tpu_custom_call.1}
  #allocation0 [shape = 'u32[]', space=smem, size = 0x4, offset = 0x4, fixed_abs, tag = 'smem constant byte address 0x4 - core index']
  #allocation1 [shape = 'u32[144,128]{1,0:T(1,128)}', space=vmem, size = 0x12000, scoped, tag = 'internal scratch']
  %s0 = inlined_call_operand.vmem [shape: f32[200,32], index: 0, kind: input, shape index: {}]
  %s1 = inlined_call_operand.vmem [shape: f32[32,128], index: 1, kind: input, shape index: {}]
  %s2 = inlined_call_operand.hbm [shape: f32[200,128], index: 2, kind: output, shape index: {}]
  %s3 = sld [smem:[#allocation0]]
  $region18: #{tpu_custom_call.1} parent=0
    _
  %s5 = ssub.s32 1, %s3
  %s6 = scalar_select 0, %s5, %s3
  $region1: #{tpu_custom_call.1} parent=0
    #allocation2 [shape = 'u8[102400]{0}', space=vmem, size = 0x19000, scoped, tag = 'output window, operand 0, single buffered']
    #allocation3 [shape = 's32[1]{0}', space=sflag, size = 0x4, scoped, tag = 'scoped memory for tpu_custom_call.1']
    %7 = vsyncpa [#allocation3], 0
    // Predicated region
    $region2: #{tpu_custom_call.1} parent=1 // pred_check
      _
    $region3: #{tpu_custom_call.1} parent=1 // pred_check_branch
      %9 = sbr.rel (0) target = $region5
    $region4: #{tpu_custom_call.1} parent=1 // pred_region
      _
    $region5: #{tpu_custom_call.1} parent=1 // pred_fallthru
      _
    // Predicated region
    $region6: #{tpu_custom_call.1} parent=1 // pred_check
      _
    $region7: #{tpu_custom_call.1} parent=1 // pred_check_branch
      %11 = sbr.rel (0) target = $region9
    $region8: #{tpu_custom_call.1} parent=1 // pred_region
      _
    $region9: #{tpu_custom_call.1} parent=1 // pred_fallthru
      _
    %v12 = vld [vmem:[%s0] sm:$0xff]
    %v13 = vld [vmem:[%s0 + $0x8] sm:$0xff]
    %v14 = vld [vmem:[%s0 + $0x10] sm:$0xff]
    %v15 = vld [vmem:[%s0 + $0x18] sm:$0xff]
    %v16 = vld [vmem:[%s0 + $0x20] sm:$0xff]
    %v17 = vld [vmem:[%s0 + $0x28] sm:$0xff]
    %v18 = vld [vmem:[%s0 + $0x30] sm:$0xff]
    %v19 = vld [vmem:[%s0 + $0x38] sm:$0xff]
    %v20 = vld [vmem:[%s0 + $0x40] sm:$0xff]
    %v21 = vld [vmem:[%s0 + $0x48] sm:$0xff]
    %v22 = vld [vmem:[%s0 + $0x50] sm:$0xff]
    %v23 = vld [vmem:[%s0 + $0x58] sm:$0xff]
    %v24 = vld [vmem:[%s0 + $0x60] sm:$0xff]
    %v25 = vld [vmem:[%s0 + $0x68] sm:$0xff]
    %v26 = vld [vmem:[%s0 + $0x70] sm:$0xff]
    %v27 = vld [vmem:[%s0 + $0x78] sm:$0xff]
    %v28 = vld [vmem:[%s0 + $0x80] sm:$0xff]
    %v29 = vld [vmem:[%s0 + $0x88] sm:$0xff]
    %v30 = vld [vmem:[%s0 + $0x90] sm:$0xff]
    %v31 = vld [vmem:[%s0 + $0x98] sm:$0xff]
    %v32 = vld [vmem:[%s0 + $0xa0] sm:$0xff]
    %v33 = vld [vmem:[%s0 + $0xa8] sm:$0xff]
    %v34 = vld [vmem:[%s0 + $0xb0] sm:$0xff]
    %v35 = vld [vmem:[%s0 + $0xb8] sm:$0xff]
    %v36 = vld [vmem:[%s0 + $0xc0] sm:$0xff]
    %v37 = vld [vmem:[%s1] sm:$0xff]
    %v38 = vld [vmem:[%s1 + $0x8] sm:$0xff]
    %v39 = vld [vmem:[%s1 + $0x10] sm:$0xff]
    %v40 = vld [vmem:[%s1 + $0x18] sm:$0xff]
    %vm41 = vcmask 261120
    %v43 = vsel %vm41, %v12, 0
    %v46 = vsel %vm41, %v13, 0
    %v49 = vsel %vm41, %v14, 0
    %v52 = vsel %vm41, %v15, 0
    %v55 = vsel %vm41, %v16, 0
    %v58 = vsel %vm41, %v17, 0
    %v61 = vsel %vm41, %v18, 0
    %v64 = vsel %vm41, %v19, 0
    %v67 = vsel %vm41, %v20, 0
    %v70 = vsel %vm41, %v21, 0
    %v73 = vsel %vm41, %v22, 0
    %v76 = vsel %vm41, %v23, 0
    %v79 = vsel %vm41, %v24, 0
    %v82 = vsel %vm41, %v25, 0
    %v85 = vsel %vm41, %v26, 0
    %v88 = vsel %vm41, %v27, 0
    %v91 = vsel %vm41, %v28, 0
    %v94 = vsel %vm41, %v29, 0
    %v97 = vsel %vm41, %v30, 0
    %v100 = vsel %vm41, %v31, 0
    %v103 = vsel %vm41, %v32, 0
    %v106 = vsel %vm41, %v33, 0
    %v109 = vsel %vm41, %v34, 0
    %v112 = vsel %vm41, %v35, 0
    %v115 = vsel %vm41, %v36, 0
    %117 = vmatprep.subr.mxu0 0.0
    %118 = vmatpush1.msra.mxu0 %v37
    %119 = vmatprep.subr.mxu0 0.0
    %120 = vmatpush1.msra.mxu0 %v38
    %121 = vmatprep.subr.mxu0 0.0
    %122 = vmatpush1.msra.mxu0 %v39
    %123 = vmatprep.subr.mxu0 0.0
    %124 = vmatpush1.msra.mxu0 %v40
    %125 = vmatprep.subr.mxu0 0.0
    %126 = vmatpush1.msra.mxu0 0.0
    %127 = vmatprep.subr.mxu0 0.0
    %128 = vmatpush1.msra.mxu0 0.0
    %129 = vmatprep.subr.mxu0 0.0
    %130 = vmatpush1.msra.mxu0 0.0
    %131 = vmatprep.subr.mxu0 0.0
    %132 = vmatpush1.msra.mxu0 0.0
    %133 = vmatprep.subr.mxu0 0.0
    %134 = vmatpush1.msra.mxu0 0.0
    %135 = vmatprep.subr.mxu0 0.0
    %136 = vmatpush1.msra.mxu0 0.0
    %137 = vmatprep.subr.mxu0 0.0
    %138 = vmatpush1.msra.mxu0 0.0
    %139 = vmatprep.subr.mxu0 0.0
    %140 = vmatpush1.msra.mxu0 0.0
    %141 = vmatprep.subr.mxu0 0.0
    %142 = vmatpush1.msra.mxu0 0.0
    %143 = vmatprep.subr.mxu0 0.0
    %144 = vmatpush1.msra.mxu0 0.0
    %145 = vmatprep.subr.mxu0 0.0
    %146 = vmatpush1.msra.mxu0 0.0
    %147 = vmatprep.subr.mxu0 0.0
    %148 = vmatpush1.msra.mxu0 0.0
    %149 = vmatprep.subr.mxu0 0.0
    %150 = vmatpush1.msra.mxu0 0.0
    %151 = vmatprep.subr.mxu0 0.0
    %152 = vmatpush1.msra.mxu0 0.0
    %153 = vmatprep.subr.mxu0 0.0
    %154 = vmatpush1.msra.mxu0 0.0
    %155 = vmatprep.subr.mxu0 0.0
    %156 = vmatpush1.msra.mxu0 0.0
    %157 = vmatprep.subr.mxu0 0.0
    %158 = vmatpush1.msra.mxu0 0.0
    %159 = vmatprep.subr.mxu0 0.0
    %160 = vmatpush1.msra.mxu0 0.0
    %161 = vmatprep.subr.mxu0 0.0
    %162 = vmatpush1.msra.mxu0 0.0
    %163 = vmatprep.subr.mxu0 0.0
    %164 = vmatpush1.msra.mxu0 0.0
    %165 = vmatprep.subr.mxu0 0.0
    %166 = vmatpush1.msra.mxu0 0.0
    %167 = vmatprep.subr.mxu0 0.0
    %168 = vmatpush1.msra.mxu0 0.0
    %169 = vmatprep.subr.mxu0 0.0
    %170 = vmatpush1.msra.mxu0 0.0
    %171 = vmatprep.subr.mxu0 0.0
    %172 = vmatpush1.msra.mxu0 0.0
    %173 = vmatprep.subr.mxu0 0.0
    %174 = vmatpush1.msra.mxu0 0.0
    %175 = vmatprep.subr.mxu0 0.0
    %176 = vmatpush1.msra.mxu0 0.0
    %177 = vmatprep.subr.mxu0 0.0
    %178 = vmatpush1.msra.mxu0 0.0
    %179 = vmatprep.subr.mxu0 0.0
    %180 = vmatpush1.msra.mxu0 0.0
    %181 = vmatprep.mubr.f32.mxu0 0.0
    %182 = vmatmul.mubr.f32.gmra.mrb[0].mxu0 %v43
    %v183 = vpop.f32.mrb[0].mxu0
    %v184 = vadd.f32 0.0, %v183
    %v185 = vpop.f32.mrb[0].mxu0
    %186 = vmatprep.mubr.f32.mxu0 0.0
    %187 = vmatmul.mubr.f32.gmra.mrb[0].mxu0 %v46
    %v188 = vpop.f32.mrb[0].mxu0
    %v189 = vadd.f32 0.0, %v188
    %v190 = vpop.f32.mrb[0].mxu0
    %191 = vmatprep.mubr.f32.mxu0 0.0
    %192 = vmatmul.mubr.f32.gmra.mrb[0].mxu0 %v49
    %v193 = vpop.f32.mrb[0].mxu0
    %v194 = vadd.f32 0.0, %v193
    %v195 = vpop.f32.mrb[0].mxu0
    %196 = vmatprep.mubr.f32.mxu0 0.0
    %197 = vmatmul.mubr.f32.gmra.mrb[0].mxu0 %v52
    %v198 = vpop.f32.mrb[0].mxu0
    %v199 = vadd.f32 0.0, %v198
    %v200 = vpop.f32.mrb[0].mxu0
    %201 = vmatprep.mubr.f32.mxu0 0.0
    %202 = vmatmul.mubr.f32.gmra.mrb[0].mxu0 %v55
    %v203 = vpop.f32.mrb[0].mxu0
    %v204 = vadd.f32 0.0, %v203
    %v205 = vpop.f32.mrb[0].mxu0
    %206 = vmatprep.mubr.f32.mxu0 0.0
    %207 = vmatmul.mubr.f32.gmra.mrb[0].mxu0 %v58
    %v208 = vpop.f32.mrb[0].mxu0
    %v209 = vadd.f32 0.0, %v208
    %v210 = vpop.f32.mrb[0].mxu0
    %211 = vmatprep.mubr.f32.mxu0 0.0
    %212 = vmatmul.mubr.f32.gmra.mrb[0].mxu0 %v61
    %v213 = vpop.f32.mrb[0].mxu0
    %v214 = vadd.f32 0.0, %v213
    %v215 = vpop.f32.mrb[0].mxu0
    %216 = vmatprep.mubr.f32.mxu0 0.0
    %217 = vmatmul.mubr.f32.gmra.mrb[0].mxu0 %v64
    %v218 = vpop.f32.mrb[0].mxu0
    %v219 = vadd.f32 0.0, %v218
    %v220 = vpop.f32.mrb[0].mxu0
    %221 = vmatprep.mubr.f32.mxu0 0.0
    %222 = vmatmul.mubr.f32.gmra.mrb[0].mxu0 %v67
    %v223 = vpop.f32.mrb[0].mxu0
    %v224 = vadd.f32 0.0, %v223
    %v225 = vpop.f32.mrb[0].mxu0
    %226 = vmatprep.mubr.f32.mxu0 0.0
    %227 = vmatmul.mubr.f32.gmra.mrb[0].mxu0 %v70
    %v228 = vpop.f32.mrb[0].mxu0
    %v229 = vadd.f32 0.0, %v228
    %v230 = vpop.f32.mrb[0].mxu0
    %231 = vmatprep.mubr.f32.mxu0 0.0
    %232 = vmatmul.mubr.f32.gmra.mrb[0].mxu0 %v73
    %v233 = vpop.f32.mrb[0].mxu0
    %v234 = vadd.f32 0.0, %v233
    %v235 = vpop.f32.mrb[0].mxu0
    %236 = vmatprep.mubr.f32.mxu0 0.0
    %237 = vmatmul.mubr.f32.gmra.mrb[0].mxu0 %v76
    %v238 = vpop.f32.mrb[0].mxu0
    %v239 = vadd.f32 0.0, %v238
    %v240 = vpop.f32.mrb[0].mxu0
    %241 = vmatprep.mubr.f32.mxu0 0.0
    %242 = vmatmul.mubr.f32.gmra.mrb[0].mxu0 %v79
    %v243 = vpop.f32.mrb[0].mxu0
    %v244 = vadd.f32 0.0, %v243
    %v245 = vpop.f32.mrb[0].mxu0
    %246 = vmatprep.mubr.f32.mxu0 0.0
    %247 = vmatmul.mubr.f32.gmra.mrb[0].mxu0 %v82
    %v248 = vpop.f32.mrb[0].mxu0
    %v249 = vadd.f32 0.0, %v248
    %v250 = vpop.f32.mrb[0].mxu0
    %251 = vmatprep.mubr.f32.mxu0 0.0
    %252 = vmatmul.mubr.f32.gmra.mrb[0].mxu0 %v85
    %v253 = vpop.f32.mrb[0].mxu0
    %v254 = vadd.f32 0.0, %v253
    %v255 = vpop.f32.mrb[0].mxu0
    %256 = vmatprep.mubr.f32.mxu0 0.0
    %257 = vmatmul.mubr.f32.gmra.mrb[0].mxu0 %v88
    %v258 = vpop.f32.mrb[0].mxu0
    %v259 = vadd.f32 0.0, %v258
    %v260 = vpop.f32.mrb[0].mxu0
    %261 = vmatprep.mubr.f32.mxu0 0.0
    %262 = vmatmul.mubr.f32.gmra.mrb[0].mxu0 %v91
    %v263 = vpop.f32.mrb[0].mxu0
    %v264 = vadd.f32 0.0, %v263
    %v265 = vpop.f32.mrb[0].mxu0
    %266 = vmatprep.mubr.f32.mxu0 0.0
    %267 = vmatmul.mubr.f32.gmra.mrb[0].mxu0 %v94
    %v268 = vpop.f32.mrb[0].mxu0
    %v269 = vadd.f32 0.0, %v268
    %v270 = vpop.f32.mrb[0].mxu0
    %271 = vmatprep.mubr.f32.mxu0 0.0
    %272 = vmatmul.mubr.f32.gmra.mrb[0].mxu0 %v97
    %v273 = vpop.f32.mrb[0].mxu0
    %v274 = vadd.f32 0.0, %v273
    %v275 = vpop.f32.mrb[0].mxu0
    %276 = vmatprep.mubr.f32.mxu0 0.0
    %277 = vmatmul.mubr.f32.gmra.mrb[0].mxu0 %v100
    %v278 = vpop.f32.mrb[0].mxu0
    %v279 = vadd.f32 0.0, %v278
    %v280 = vpop.f32.mrb[0].mxu0
    %281 = vmatprep.mubr.f32.mxu0 0.0
    %282 = vmatmul.mubr.f32.gmra.mrb[0].mxu0 %v103
    %v283 = vpop.f32.mrb[0].mxu0
    %v284 = vadd.f32 0.0, %v283
    %v285 = vpop.f32.mrb[0].mxu0
    %286 = vmatprep.mubr.f32.mxu0 0.0
    %287 = vmatmul.mubr.f32.gmra.mrb[0].mxu0 %v106
    %v288 = vpop.f32.mrb[0].mxu0
    %v289 = vadd.f32 0.0, %v288
    %v290 = vpop.f32.mrb[0].mxu0
    %291 = vmatprep.mubr.f32.mxu0 0.0
    %292 = vmatmul.mubr.f32.gmra.mrb[0].mxu0 %v109
    %v293 = vpop.f32.mrb[0].mxu0
    %v294 = vadd.f32 0.0, %v293
    %v295 = vpop.f32.mrb[0].mxu0
    %296 = vmatprep.mubr.f32.mxu0 0.0
    %297 = vmatmul.mubr.f32.gmra.mrb[0].mxu0 %v112
    %v298 = vpop.f32.mrb[0].mxu0
    %v299 = vadd.f32 0.0, %v298
    %v300 = vpop.f32.mrb[0].mxu0
    %301 = vmatprep.mubr.f32.mxu0 0.0
    %302 = vmatmul.mubr.f32.gmra.mrb[0].mxu0 %v115
    %v303 = vpop.f32.mrb[0].mxu0
    %v304 = vadd.f32 0.0, %v303
    %v305 = vpop.f32.mrb[0].mxu0
    %306 = vdwg.mxu0
    %307 = vst [vmem:[#allocation2] sm:$0xff] %v184
    %308 = vst [vmem:[#allocation2 + $0x8] sm:$0xff] %v189
    %309 = vst [vmem:[#allocation2 + $0x10] sm:$0xff] %v194
    %310 = vst [vmem:[#allocation2 + $0x18] sm:$0xff] %v199
    %311 = vst [vmem:[#allocation2 + $0x20] sm:$0xff] %v204
    %312 = vst [vmem:[#allocation2 + $0x28] sm:$0xff] %v209
    %313 = vst [vmem:[#allocation2 + $0x30] sm:$0xff] %v214
    %314 = vst [vmem:[#allocation2 + $0x38] sm:$0xff] %v219
    %315 = vst [vmem:[#allocation2 + $0x40] sm:$0xff] %v224
    %316 = vst [vmem:[#allocation2 + $0x48] sm:$0xff] %v229
    %317 = vst [vmem:[#allocation2 + $0x50] sm:$0xff] %v234
    %318 = vst [vmem:[#allocation2 + $0x58] sm:$0xff] %v239
    %319 = vst [vmem:[#allocation2 + $0x60] sm:$0xff] %v244
    %320 = vst [vmem:[#allocation2 + $0x68] sm:$0xff] %v249
    %321 = vst [vmem:[#allocation2 + $0x70] sm:$0xff] %v254
    %322 = vst [vmem:[#allocation2 + $0x78] sm:$0xff] %v259
    %323 = vst [vmem:[#allocation2 + $0x80] sm:$0xff] %v264
    %324 = vst [vmem:[#allocation2 + $0x88] sm:$0xff] %v269
    %325 = vst [vmem:[#allocation2 + $0x90] sm:$0xff] %v274
    %326 = vst [vmem:[#allocation2 + $0x98] sm:$0xff] %v279
    %327 = vst [vmem:[#allocation2 + $0xa0] sm:$0xff] %v284
    %328 = vst [vmem:[#allocation2 + $0xa8] sm:$0xff] %v289
    %329 = vst [vmem:[#allocation2 + $0xb0] sm:$0xff] %v294
    %330 = vst [vmem:[#allocation2 + $0xb8] sm:$0xff] %v299
    %331 = vst [vmem:[#allocation2 + $0xc0] sm:$0xff] %v304
    // Predicated region
    $region10: #{tpu_custom_call.1} parent=1 // pred_check
      _
    $region11: #{tpu_custom_call.1} parent=1 // pred_check_branch
      %333 = sbr.rel (0) target = $region13
    $region12: #{tpu_custom_call.1} parent=1 // pred_region
      %s335 = ssub.s32 3200, 3200
      %336 = vsyncadd [#allocation3], %s335
      %s337 = sshll.u32 [#allocation2], 4
      %s338 = int_to_ptr.vmem [resolvable:$true] %s337
      %343 = dma.vmem_to_hbm [thread:$0]  %s338, 3200, %s2, [#allocation3], 128, 128, 8
    $region13: #{tpu_custom_call.1} parent=1 // pred_fallthru
      _
    // Predicated region
    $region14: #{tpu_custom_call.1} parent=1 // pred_check
      _
    $region15: #{tpu_custom_call.1} parent=1 // pred_check_branch
      %345 = sbr.rel (0) target = $region17
    $region16: #{tpu_custom_call.1} parent=1 // pred_region
      %346 = dma.done [#allocation3], 3200
    $region17: #{tpu_custom_call.1} parent=1 // pred_fallthru
      _
    %347 = vsyncpa [#allocation3], 1

</llo_original>
